<compile_context>
chip_gen: v7x
topology: tpu7x:2x2x1
jax: 0.10.0
libtpu: 0.0.40
codegen_flags: <defaults>
</compile_context>

<pallas_src>
import jax
import jax.numpy as jnp
from jax.experimental import pallas as pl
from jax.experimental.pallas import tpu as pltpu

# ---------------------------------------------------------------------------
# Problem sizes (small core dims consistent with the module's constructor;
# many independent sequences stacked along the batch axis for MXU efficiency)
# ---------------------------------------------------------------------------
TOTAL_ROWS = 256            # stacked sequences (batch axis)
TILE_ROWS = 128             # batch-tile rows per grid step (multiple of 8)
DYADIC_DEPTH = 3            # == len(models) == number of signature groups
SIG_FEATURES = 32           # per-group signature feature size
MODEL_OUT_CHANNELS = 16     # "hidden layer size" emitted by each sub-model
HIDDEN_CHANNELS = 32        # hidden_channels of the top MLP
OUT_CHANNELS = 8            # out_channels of the top MLP
OUT_PAD = 128               # lane-dense padded output width (full vreg lanes)


# ---------------------------------------------------------------------------
# Pallas kernel: fused (sub-models ∘ linear_one) -> relu -> linear_two
# ---------------------------------------------------------------------------
def dyadic_fused_kernel(x_ref, wf_ref, w2_ref, bias_ref, out_ref):
    # x_ref:    (TILE_ROWS, D*S)  flattened signature groups for this tile
    # wf_ref:   (D*S, H)          fused (per-level linear ∘ linear_one) weight
    # w2_ref:   (H, OUT_PAD)      linear_two weight, zero-padded to 128 lanes
    # bias_ref: (8, OUT_PAD)      row 0 = fused hidden bias, row 1 = padded out bias
    # out_ref:  (TILE_ROWS, OUT_PAD)
    b_hidden = bias_ref[0:1, :HIDDEN_CHANNELS]                    # (1, H)
    b_out = bias_ref[1:2, :]                                      # (1, OUT_PAD)
    h = jnp.dot(x_ref[...], wf_ref[...],
                preferred_element_type=jnp.float32) + b_hidden
    h = jnp.maximum(h, 0.0)                                       # relu
    out_ref[...] = jnp.dot(h, w2_ref[...],
                           preferred_element_type=jnp.float32) + b_out


def dyadic_model_sequence(signatures, params, *, tile=TILE_ROWS):
    """signatures: (D, N, S) f32 stacked signature groups; N % tile == 0."""
    wm, bm, w1, b1, w2, b2 = params
    D, N, S = signatures.shape
    C = wm.shape[2]
    H = w1.shape[1]
    O = w2.shape[1]
    assert N % tile == 0

    # ---- host-side algebraic fusion (fold per-level linears into linear_one)
    # w1 viewed per level: (D, C, H); w_fused[d] = wm[d] @ w1_block[d]
    w1_blocks = w1.reshape(D, C, H)
    w_fused = jnp.einsum('dsc,dch->dsh', wm, w1_blocks).reshape(D * S, H)
    b_fused = jnp.einsum('dxc,dch->xh', bm, w1_blocks)[0] + b1[0]        # (H,)

    # ---- lane-dense output + consolidated bias buffer
    w2_pad = jnp.zeros((H, OUT_PAD), jnp.float32).at[:, :O].set(w2)
    bias_buf = jnp.zeros((8, OUT_PAD), jnp.float32)
    bias_buf = bias_buf.at[0, :H].set(b_fused)
    bias_buf = bias_buf.at[1, :O].set(b2[0])

    # ---- layout: (D, N, S) -> (N, D*S) so a single matmul consumes every
    # dyadic level (this replaces the in-kernel concat)
    x = jnp.transpose(signatures, (1, 0, 2)).reshape(N, D * S)

    out_pad = pl.pallas_call(
        dyadic_fused_kernel,
        out_shape=jax.ShapeDtypeStruct((N, OUT_PAD), jnp.float32),
        grid_spec=pltpu.PrefetchScalarGridSpec(
            num_scalar_prefetch=0,
            grid=(N // tile,),
            in_specs=[
                pl.BlockSpec((tile, D * S), lambda i: (i, 0)),   # streamed
                pl.BlockSpec((D * S, H), lambda i: (0, 0)),      # VMEM-resident
                pl.BlockSpec((H, OUT_PAD), lambda i: (0, 0)),    # VMEM-resident
                pl.BlockSpec((8, OUT_PAD), lambda i: (0, 0)),    # VMEM-resident
            ],
            out_specs=pl.BlockSpec((tile, OUT_PAD), lambda i: (i, 0)),
        ),
        compiler_params=pltpu.CompilerParams(
            dimension_semantics=("parallel",)),
    )(x, w_fused, w2_pad, bias_buf)

    return out_pad[:, :O]


# ---------------------------------------------------------------------------
# Deterministic parameter initialization (shapes implied by __init__)
# ---------------------------------------------------------------------------
def init_params(key):
    ks = jax.random.split(key, 6)
    wm = jax.random.normal(ks[0], (DYADIC_DEPTH, SIG_FEATURES, MODEL_OUT_CHANNELS),
                           jnp.float32) * 0.1
    bm = jax.random.normal(ks[1], (DYADIC_DEPTH, 1, MODEL_OUT_CHANNELS),
                           jnp.float32) * 0.1
    w1 = jax.random.normal(ks[2], (DYADIC_DEPTH * MODEL_OUT_CHANNELS, HIDDEN_CHANNELS),
                           jnp.float32) * 0.1
    b1 = jax.random.normal(ks[3], (1, HIDDEN_CHANNELS), jnp.float32) * 0.1
    w2 = jax.random.normal(ks[4], (HIDDEN_CHANNELS, OUT_CHANNELS),
                           jnp.float32) * 0.1
    b2 = jax.random.normal(ks[5], (1, OUT_CHANNELS), jnp.float32) * 0.1
    return wm, bm, w1, b1, w2, b2


def reference_forward(signatures, params):
    """Pure-JAX reference matching the PyTorch forward semantics exactly
    (per-level linear -> concat -> linear_one -> relu -> linear_two)."""
    wm, bm, w1, b1, w2, b2 = params
    xs = [signatures[d] @ wm[d] + bm[d] for d in range(DYADIC_DEPTH)]
    x = jnp.concatenate(xs, axis=1)          # torch.cat(xs, dim=1)
    x = x @ w1 + b1                           # linear_one
    x = jnp.maximum(x, 0.0)                   # relu
    x = x @ w2 + b2                           # linear_two
    return x


if __name__ == "__main__":
    key = jax.random.PRNGKey(0)
    k_sig, k_par = jax.random.split(key)

    # stacked signature groups: one group per dyadic level, many sequences
    signatures = jax.random.normal(
        k_sig, (DYADIC_DEPTH, TOTAL_ROWS, SIG_FEATURES), jnp.float32)
    params = init_params(k_par)

    out = dyadic_model_sequence(signatures, params)
    out = jax.block_until_ready(out)

    ref = reference_forward(signatures, params)
    assert out.shape == (TOTAL_ROWS, OUT_CHANNELS)
    # fusion changes accumulation order slightly; still well within f32 tol
    assert jnp.allclose(out, ref, atol=1e-4, rtol=1e-4)

    print("KERNEL_OK")
</pallas_src>

<mosaic_0001>
module attributes {stable_mosaic.version = 11 : i64} {
  func.func @dyadic_fused_kernel(%arg0: i32, %arg1: memref<128x96xf32, #tpu.memory_space<vmem>>, %arg2: memref<96x32xf32, #tpu.memory_space<vmem>>, %arg3: memref<32x128xf32, #tpu.memory_space<vmem>>, %arg4: memref<8x128xf32, #tpu.memory_space<vmem>>, %arg5: memref<128x128xf32, #tpu.memory_space<vmem>>) attributes {dimension_semantics = [#tpu.dimension_semantics<parallel>], iteration_bounds = array<i64: 2>, scalar_prefetch = 0 : i64, scratch_operands = 0 : i64, tpu.core_type = #tpu.core_type<tc>, window_params = [{transform_indices = @transform_0, window_bounds = array<i64: 128, 96>}, {pipeline_mode = #tpu.pipeline_mode<synchronous>, transform_indices = @transform_1, window_bounds = array<i64: 96, 32>}, {pipeline_mode = #tpu.pipeline_mode<synchronous>, transform_indices = @transform_2, window_bounds = array<i64: 32, 128>}, {pipeline_mode = #tpu.pipeline_mode<synchronous>, transform_indices = @transform_3, window_bounds = array<i64: 8, 128>}, {transform_indices = @transform_4, window_bounds = array<i64: 128, 128>}]} {
    %c0 = arith.constant 0 : index
    %c0_0 = arith.constant 0 : index
    %0 = vector.load %arg4[%c0, %c0_0] : memref<8x128xf32, #tpu.memory_space<vmem>>, vector<1x32xf32>
    %c1 = arith.constant 1 : index
    %c0_1 = arith.constant 0 : index
    %1 = vector.load %arg4[%c1, %c0_1] : memref<8x128xf32, #tpu.memory_space<vmem>>, vector<1x128xf32>
    %c0_2 = arith.constant 0 : index
    %c0_3 = arith.constant 0 : index
    %2 = vector.load %arg1[%c0_2, %c0_3] : memref<128x96xf32, #tpu.memory_space<vmem>>, vector<128x96xf32>
    %c0_4 = arith.constant 0 : index
    %c0_5 = arith.constant 0 : index
    %3 = vector.load %arg2[%c0_4, %c0_5] : memref<96x32xf32, #tpu.memory_space<vmem>>, vector<96x32xf32>
    %cst = arith.constant dense<0.000000e+00> : vector<128x32xf32>
    %4 = tpu.matmul %2, %3, %cst {dimension_numbers = #tpu.dot_dimension_numbers<[1], [0], [0], [1], [0, 0, 1, 1], [], []>} : vector<128x96xf32>, vector<96x32xf32>, vector<128x32xf32> -> vector<128x32xf32>
    %5 = vector.broadcast %0 : vector<1x32xf32> to vector<128x32xf32>
    %6 = arith.addf %4, %5 : vector<128x32xf32>
    %cst_6 = arith.constant 0.000000e+00 : f32
    %7 = vector.broadcast %cst_6 : f32 to vector<128x32xf32>
    %8 = arith.maximumf %6, %7 : vector<128x32xf32>
    %c0_7 = arith.constant 0 : index
    %c0_8 = arith.constant 0 : index
    %9 = vector.load %arg3[%c0_7, %c0_8] : memref<32x128xf32, #tpu.memory_space<vmem>>, vector<32x128xf32>
    %cst_9 = arith.constant dense<0.000000e+00> : vector<128x128xf32>
    %10 = tpu.matmul %8, %9, %cst_9 {dimension_numbers = #tpu.dot_dimension_numbers<[1], [0], [0], [1], [0, 0, 1, 1], [], []>} : vector<128x32xf32>, vector<32x128xf32>, vector<128x128xf32> -> vector<128x128xf32>
    %11 = vector.broadcast %1 : vector<1x128xf32> to vector<128x128xf32>
    %12 = arith.addf %10, %11 : vector<128x128xf32>
    %c0_10 = arith.constant 0 : index
    %c0_11 = arith.constant 0 : index
    %13 = vector.load %arg5[%c0_10, %c0_11] : memref<128x128xf32, #tpu.memory_space<vmem>>, vector<128x128xf32>
    tpu.vector_store %arg5[%c0_10, %c0_11], %12 {strides = array<i32>} : memref<128x128xf32, #tpu.memory_space<vmem>>, vector<128x128xf32>,
    return
  }
  func.func @transform_0(%arg0: i32) -> (i32, i32) {
    %c0_i32 = arith.constant 0 : i32
    %c0_i32_0 = arith.constant 0 : i32
    return %arg0, %c0_i32 : i32, i32
  }
  func.func @transform_1(%arg0: i32) -> (i32, i32) {
    %c0_i32 = arith.constant 0 : i32
    %c0_i32_0 = arith.constant 0 : i32
    %c0_i32_1 = arith.constant 0 : i32
    return %c0_i32, %c0_i32_0 : i32, i32
  }
  func.func @transform_2(%arg0: i32) -> (i32, i32) {
    %c0_i32 = arith.constant 0 : i32
    %c0_i32_0 = arith.constant 0 : i32
    %c0_i32_1 = arith.constant 0 : i32
    return %c0_i32, %c0_i32_0 : i32, i32
  }
  func.func @transform_3(%arg0: i32) -> (i32, i32) {
    %c0_i32 = arith.constant 0 : i32
    %c0_i32_0 = arith.constant 0 : i32
    %c0_i32_1 = arith.constant 0 : i32
    return %c0_i32, %c0_i32_0 : i32, i32
  }
  func.func @transform_4(%arg0: i32) -> (i32, i32) {
    %c0_i32 = arith.constant 0 : i32
    %c0_i32_0 = arith.constant 0 : i32
    return %arg0, %c0_i32 : i32, i32
  }
}

</mosaic_0001>

<llo_original>
// kernel: tpu_custom_call.1
$region0: #{tpu_custom_call.1}
  #allocation0 [shape = 'u32[]', space=smem, size = 0x4, offset = 0x4, fixed_abs, tag = 'smem constant byte address 0x4 - core index']
  #allocation1 [shape = 'u32[144,128]{1,0:T(1,128)}', space=vmem, size = 0x12000, scoped, tag = 'internal scratch']
  %s0 = inlined_call_operand.vmem [shape: f32[256,96], index: 0, kind: input, shape index: {}]
  %s1 = inlined_call_operand.vmem [shape: f32[96,32], index: 1, kind: input, shape index: {}]
  %s2 = inlined_call_operand.vmem [shape: f32[32,128], index: 2, kind: input, shape index: {}]
  %s3 = inlined_call_operand.vmem [shape: f32[8,128], index: 3, kind: input, shape index: {}]
  %s4 = inlined_call_operand.hbm [shape: f32[256,128], index: 4, kind: output, shape index: {}]
  %s5 = sld [smem:[#allocation0]]
  $region49: #{tpu_custom_call.1} parent=0
    _
  %s7 = ssub.s32 1, %s5
  %s8 = scalar_select 0, %s7, %s5
  $region1: #{tpu_custom_call.1} parent=0
    #allocation2 [shape = 'u8[131072]{0}', space=vmem, size = 0x20000, scoped, tag = 'output window, operand 0']
    #allocation3 [shape = 's32[2]{0}', space=sflag, size = 0x8, scoped, tag = 'scoped memory for tpu_custom_call.1']
    %9 = vsyncpa [#allocation3], 0
    %s10 = scalar_lea.sflag [#allocation3], 1
    %11 = vsyncpa %s10, 0
    loop: start=0, step=1, limit=4
    $region2: #{tpu_custom_call.1} parent=1 // loop_pre_header
      _
    $region3: #{tpu_custom_call.1} parent=1 // loop_header
      %s13 = sphi 0, %s17
      %p14 = scmp.ge.s32.totalorder %s13, 4
      %s23 = sphi 0, %s25
      %s26 = sphi 0, %s23
      %s27 = sphi 0, %s26
      %s43 = sphi 0, %s27
      %s47 = sphi 0, %s47
      %s49 = sphi 0, %s47
      %s50 = sphi 0, %s49
      %s64 = sphi 0, %s50
      %s68 = sphi 0, %s68
      %s70 = sphi 0, %s68
      %s71 = sphi 0, %s70
      %s85 = sphi 0, %s71
      %s89 = sphi 0, %s89
      %s91 = sphi 0, %s89
      %s92 = sphi 0, %s91
      %s106 = sphi 0, %s92
      %s112 = sphi 0, %s114
      %s115 = sphi 0, %s112
      %s116 = sphi 0, %s115
      %s132 = sphi 0, %s116
    $region4: #{tpu_custom_call.1} parent=1 // loop_header_branch
      %16 = sbr.rel (%p14) target = $region8
    $region5: #{tpu_custom_call.1} parent=1 // loop_body
      %s18 = ssub.s32 %s13, 1
      %s19 = ssub.s32 %s13, 2
      %s20 = sadd.s32 %s13, 1
      %s21 = ssub.s32 %s13, %s20
      %p22 = scmp.eq.s32.totalorder %s21, 0
      %s24 = sadd.s32 %s23, 1
      %s25 = scalar_select %p22, %s23, %s24
      %p28 = pneg %p22
      %p29 = scmp.eq.s32.totalorder %s13, 1
      %p30 = por %p28, %p29
      %p31 = scmp.ne.s32.totalorder %s23, %s26
      %p32 = scmp.eq.s32.totalorder %s13, 0
      %p33 = por %p31, %p32
      %p34 = scmp.ne.s32.totalorder %s23, %s26
      %p35 = scmp.eq.s32.totalorder %s18, 1
      %p36 = por %p34, %p35
      %p37 = scmp.ne.s32.totalorder %s26, %s27
      %p38 = scmp.eq.s32.totalorder %s18, 0
      %p39 = por %p37, %p38
      %p40 = scmp.ne.s32.totalorder %s26, %s27
      %p41 = scmp.eq.s32.totalorder %s19, 1
      %p42 = por %p40, %p41
      %p44 = scmp.ne.s32.totalorder %s27, %s43
      %p45 = scmp.eq.s32.totalorder %s19, 0
      %p46 = por %p44, %p45
      %s48 = sadd.s32 %s47, 1
      %p51 = scmp.eq.s32.totalorder %s13, 1
      %p52 = scmp.ne.s32.totalorder %s47, %s49
      %p53 = scmp.eq.s32.totalorder %s13, 0
      %p54 = por %p52, %p53
      %p55 = scmp.ne.s32.totalorder %s47, %s49
      %p56 = scmp.eq.s32.totalorder %s18, 1
      %p57 = por %p55, %p56
      %p58 = scmp.ne.s32.totalorder %s49, %s50
      %p59 = scmp.eq.s32.totalorder %s18, 0
      %p60 = por %p58, %p59
      %p61 = scmp.ne.s32.totalorder %s49, %s50
      %p62 = scmp.eq.s32.totalorder %s19, 1
      %p63 = por %p61, %p62
      %p65 = scmp.ne.s32.totalorder %s50, %s64
      %p66 = scmp.eq.s32.totalorder %s19, 0
      %p67 = por %p65, %p66
      %s69 = sadd.s32 %s68, 1
      %p72 = scmp.eq.s32.totalorder %s13, 1
      %p73 = scmp.ne.s32.totalorder %s68, %s70
      %p74 = scmp.eq.s32.totalorder %s13, 0
      %p75 = por %p73, %p74
      %p76 = scmp.ne.s32.totalorder %s68, %s70
      %p77 = scmp.eq.s32.totalorder %s18, 1
      %p78 = por %p76, %p77
      %p79 = scmp.ne.s32.totalorder %s70, %s71
      %p80 = scmp.eq.s32.totalorder %s18, 0
      %p81 = por %p79, %p80
      %p82 = scmp.ne.s32.totalorder %s70, %s71
      %p83 = scmp.eq.s32.totalorder %s19, 1
      %p84 = por %p82, %p83
      %p86 = scmp.ne.s32.totalorder %s71, %s85
      %p87 = scmp.eq.s32.totalorder %s19, 0
      %p88 = por %p86, %p87
      %s90 = sadd.s32 %s89, 1
      %p93 = scmp.eq.s32.totalorder %s13, 1
      %p94 = scmp.ne.s32.totalorder %s89, %s91
      %p95 = scmp.eq.s32.totalorder %s13, 0
      %p96 = por %p94, %p95
      %p97 = scmp.ne.s32.totalorder %s89, %s91
      %p98 = scmp.eq.s32.totalorder %s18, 1
      %p99 = por %p97, %p98
      %p100 = scmp.ne.s32.totalorder %s91, %s92
      %p101 = scmp.eq.s32.totalorder %s18, 0
      %p102 = por %p100, %p101
      %p103 = scmp.ne.s32.totalorder %s91, %s92
      %p104 = scmp.eq.s32.totalorder %s19, 1
      %p105 = por %p103, %p104
      %p107 = scmp.ne.s32.totalorder %s92, %s106
      %p108 = scmp.eq.s32.totalorder %s19, 0
      %p109 = por %p107, %p108
      %s110 = ssub.s32 %s13, %s20
      %p111 = scmp.eq.s32.totalorder %s110, 0
      %s113 = sadd.s32 %s112, 1
      %s114 = scalar_select %p111, %s112, %s113
      %p117 = pneg %p111
      %p118 = scmp.eq.s32.totalorder %s13, 1
      %p119 = por %p117, %p118
      %p120 = scmp.ne.s32.totalorder %s112, %s115
      %p121 = scmp.eq.s32.totalorder %s13, 0
      %p122 = por %p120, %p121
      %p123 = scmp.ne.s32.totalorder %s112, %s115
      %p124 = scmp.eq.s32.totalorder %s18, 1
      %p125 = por %p123, %p124
      %p126 = scmp.ne.s32.totalorder %s115, %s116
      %p127 = scmp.eq.s32.totalorder %s18, 0
      %p128 = por %p126, %p127
      %p129 = scmp.ne.s32.totalorder %s115, %s116
      %p130 = scmp.eq.s32.totalorder %s19, 1
      %p131 = por %p129, %p130
      %p133 = scmp.ne.s32.totalorder %s116, %s132
      %p134 = scmp.eq.s32.totalorder %s19, 0
      %p135 = por %p133, %p134
      %p136 = scmp.le.s32.totalorder 1, %s13
      %p137 = scmp.lt.s32.totalorder %s13, 3
      %p138 = pnand %p136, %p137
      %p139 = pneg %p138
      // Predicated region
      $region9: #{tpu_custom_call.1} parent=5 // pred_check
        _
      $region10: #{tpu_custom_call.1} parent=5 // pred_check_branch
        %141 = sbr.rel (%p138) target = $region12
      $region11: #{tpu_custom_call.1} parent=5 // pred_region
        %s142 = ssub.s32 %s13, 1
        // Predicated region
        $region13: #{tpu_custom_call.1} parent=11 // pred_check
          %p143 = pneg %p60
        $region14: #{tpu_custom_call.1} parent=11 // pred_check_branch
          %145 = sbr.rel (%p143) target = $region16
        $region15: #{tpu_custom_call.1} parent=11 // pred_region
          _
        $region16: #{tpu_custom_call.1} parent=11 // pred_fallthru
          _
        // Predicated region
        $region17: #{tpu_custom_call.1} parent=11 // pred_check
          %p146 = pneg %p81
        $region18: #{tpu_custom_call.1} parent=11 // pred_check_branch
          %148 = sbr.rel (%p146) target = $region20
        $region19: #{tpu_custom_call.1} parent=11 // pred_region
          _
        $region20: #{tpu_custom_call.1} parent=11 // pred_fallthru
          _
        // Predicated region
        $region21: #{tpu_custom_call.1} parent=11 // pred_check
          %p149 = pneg %p102
        $region22: #{tpu_custom_call.1} parent=11 // pred_check_branch
          %151 = sbr.rel (%p149) target = $region24
        $region23: #{tpu_custom_call.1} parent=11 // pred_region
          _
        $region24: #{tpu_custom_call.1} parent=11 // pred_fallthru
          _
      $region12: #{tpu_custom_call.1} parent=5 // pred_fallthru
        _
      %p152 = scmp.lt.s32.totalorder %s13, 2
      // Predicated region
      $region25: #{tpu_custom_call.1} parent=5 // pred_check
        %p153 = pneg %p152
      $region26: #{tpu_custom_call.1} parent=5 // pred_check_branch
        %155 = sbr.rel (%p153) target = $region28
      $region27: #{tpu_custom_call.1} parent=5 // pred_region
        // Predicated region
        $region29: #{tpu_custom_call.1} parent=27 // pred_check
          %p156 = pneg %p33
        $region30: #{tpu_custom_call.1} parent=27 // pred_check_branch
          %158 = sbr.rel (%p156) target = $region32
        $region31: #{tpu_custom_call.1} parent=27 // pred_region
          %s159 = smul.u32 16, %s13
          %p160 = scmp.lt.s32.totalorder %s159, 31
          %s161 = scalar_select %p160, %s159, 31
          %s162 = smul.addr %s161, 8
          %s163 = scalar_lea.vmem %s0, %s162
          %s164 = smul.u32 16, %s13
        $region32: #{tpu_custom_call.1} parent=27 // pred_fallthru
          _
      $region28: #{tpu_custom_call.1} parent=5 // pred_fallthru
        _
      %p165 = scmp.le.s32.totalorder 1, %s13
      %p166 = scmp.lt.s32.totalorder %s13, 3
      %p167 = pnand %p165, %p166
      %p168 = pneg %p167
      // Predicated region
      $region33: #{tpu_custom_call.1} parent=5 // pred_check
        _
      $region34: #{tpu_custom_call.1} parent=5 // pred_check_branch
        %170 = sbr.rel (%p167) target = $region36
      $region35: #{tpu_custom_call.1} parent=5 // pred_region
        %s171 = ssub.s32 %s13, 1
        %s172 = smul.u32 16, %s18
        %p173 = scmp.lt.s32.totalorder %s172, 31
        %s174 = scalar_select %p173, %s172, 31
        %s175 = smul.addr %s174, 8
        %s176 = scalar_lea.vmem %s0, %s175
        %p177 = pneg %p39
        %p178 = pneg %p36
        %p179 = pneg %p60
        %p180 = pneg %p57
        %p181 = pneg %p81
        %p182 = pneg %p78
        %p183 = pneg %p102
        %p184 = pneg %p99
        %p185 = pneg %p128
        %p186 = pneg %p125
        %s187 = sand.u32 %s115, 1
        %s188 = scalar_lea.sflag [#allocation3], %s187
        %s189 = sand.u32 %s115, 1
        %s190 = smul.addr %s189, 128
        %s191 = scalar_lea.vmem [#allocation2], %s190
        %s192 = smul.u32 16, %s18
        %p193 = scmp.lt.s32.totalorder %s192, 31
        %s194 = scalar_select %p193, %s192, 31
        %s195 = smul.addr %s194, 8
        %s196 = scalar_lea.vmem %s0, %s195
        %s197 = smul.u32 16, %s18
        %s198 = smul.u32 16, %s18
        %v199 = vld [vmem:[%s3] sm:$0x1]
        %v200 = vld [vmem:[%s3 + $0x1] sm:$0x1]
        %v201 = vld [vmem:[%s196] sm:$0xff]
        %v202 = vld [vmem:[%s196 + $0x8] sm:$0xff]
        %v203 = vld [vmem:[%s196 + $0x10] sm:$0xff]
        %v204 = vld [vmem:[%s196 + $0x18] sm:$0xff]
        %v205 = vld [vmem:[%s196 + $0x20] sm:$0xff]
        %v206 = vld [vmem:[%s196 + $0x28] sm:$0xff]
        %v207 = vld [vmem:[%s196 + $0x30] sm:$0xff]
        %v208 = vld [vmem:[%s196 + $0x38] sm:$0xff]
        %v209 = vld [vmem:[%s196 + $0x40] sm:$0xff]
        %v210 = vld [vmem:[%s196 + $0x48] sm:$0xff]
        %v211 = vld [vmem:[%s196 + $0x50] sm:$0xff]
        %v212 = vld [vmem:[%s196 + $0x58] sm:$0xff]
        %v213 = vld [vmem:[%s196 + $0x60] sm:$0xff]
        %v214 = vld [vmem:[%s196 + $0x68] sm:$0xff]
        %v215 = vld [vmem:[%s196 + $0x70] sm:$0xff]
        %v216 = vld [vmem:[%s196 + $0x78] sm:$0xff]
        %v217 = vld [vmem:[%s1] sm:$0xff]
        %v218 = vld [vmem:[%s1 + $0x8] sm:$0xff]
        %v219 = vld [vmem:[%s1 + $0x10] sm:$0xff]
        %v220 = vld [vmem:[%s1 + $0x18] sm:$0xff]
        %v221 = vld [vmem:[%s1 + $0x20] sm:$0xff]
        %v222 = vld [vmem:[%s1 + $0x28] sm:$0xff]
        %v223 = vld [vmem:[%s1 + $0x30] sm:$0xff]
        %v224 = vld [vmem:[%s1 + $0x38] sm:$0xff]
        %v225 = vld [vmem:[%s1 + $0x40] sm:$0xff]
        %v226 = vld [vmem:[%s1 + $0x48] sm:$0xff]
        %v227 = vld [vmem:[%s1 + $0x50] sm:$0xff]
        %v228 = vld [vmem:[%s1 + $0x58] sm:$0xff]
        %v229 = vlaneseq
        %v230 = vshrl.u32 %v229, 7
        %v231 = vsub.s32 0, %v230
        %v232 = vrot.slane %v199, %v231
        %vm233 = vcmask 785408
        %v235 = vsel %vm233, %v201, 0
        %v238 = vsel %vm233, %v202, 0
        %v241 = vsel %vm233, %v203, 0
        %v244 = vsel %vm233, %v204, 0
        %v247 = vsel %vm233, %v205, 0
        %v250 = vsel %vm233, %v206, 0
        %v253 = vsel %vm233, %v207, 0
        %v256 = vsel %vm233, %v208, 0
        %v259 = vsel %vm233, %v209, 0
        %v262 = vsel %vm233, %v210, 0
        %v265 = vsel %vm233, %v211, 0
        %v268 = vsel %vm233, %v212, 0
        %v271 = vsel %vm233, %v213, 0
        %v274 = vsel %vm233, %v214, 0
        %v277 = vsel %vm233, %v215, 0
        %v280 = vsel %vm233, %v216, 0
        %282 = vmatprep.subr.mxu0 0.0
        %283 = vmatpush1.msra.mxu0 %v217
        %284 = vmatprep.subr.mxu0 0.0
        %285 = vmatpush1.msra.mxu0 %v218
        %286 = vmatprep.subr.mxu0 0.0
        %287 = vmatpush1.msra.mxu0 %v219
        %288 = vmatprep.subr.mxu0 0.0
        %289 = vmatpush1.msra.mxu0 %v220
        %290 = vmatprep.subr.mxu0 0.0
        %291 = vmatpush1.msra.mxu0 %v221
        %292 = vmatprep.subr.mxu0 0.0
        %293 = vmatpush1.msra.mxu0 %v222
        %294 = vmatprep.subr.mxu0 0.0
        %295 = vmatpush1.msra.mxu0 %v223
        %296 = vmatprep.subr.mxu0 0.0
        %297 = vmatpush1.msra.mxu0 %v224
        %298 = vmatprep.subr.mxu0 0.0
        %299 = vmatpush1.msra.mxu0 %v225
        %300 = vmatprep.subr.mxu0 0.0
        %301 = vmatpush1.msra.mxu0 %v226
        %302 = vmatprep.subr.mxu0 0.0
        %303 = vmatpush1.msra.mxu0 %v227
        %304 = vmatprep.subr.mxu0 0.0
        %305 = vmatpush1.msra.mxu0 %v228
        %306 = vmatprep.subr.mxu0 0.0
        %307 = vmatpush1.msra.mxu0 0.0
        %308 = vmatprep.subr.mxu0 0.0
        %309 = vmatpush1.msra.mxu0 0.0
        %310 = vmatprep.subr.mxu0 0.0
        %311 = vmatpush1.msra.mxu0 0.0
        %312 = vmatprep.subr.mxu0 0.0
        %313 = vmatpush1.msra.mxu0 0.0
        %314 = vmatprep.subr.mxu0 0.0
        %315 = vmatpush1.msra.mxu0 0.0
        %316 = vmatprep.subr.mxu0 0.0
        %317 = vmatpush1.msra.mxu0 0.0
        %318 = vmatprep.subr.mxu0 0.0
        %319 = vmatpush1.msra.mxu0 0.0
        %320 = vmatprep.subr.mxu0 0.0
        %321 = vmatpush1.msra.mxu0 0.0
        %322 = vmatprep.subr.mxu0 0.0
        %323 = vmatpush1.msra.mxu0 0.0
        %324 = vmatprep.subr.mxu0 0.0
        %325 = vmatpush1.msra.mxu0 0.0
        %326 = vmatprep.subr.mxu0 0.0
        %327 = vmatpush1.msra.mxu0 0.0
        %328 = vmatprep.subr.mxu0 0.0
        %329 = vmatpush1.msra.mxu0 0.0
        %330 = vmatprep.subr.mxu0 0.0
        %331 = vmatpush1.msra.mxu0 0.0
        %332 = vmatprep.subr.mxu0 0.0
        %333 = vmatpush1.msra.mxu0 0.0
        %334 = vmatprep.subr.mxu0 0.0
        %335 = vmatpush1.msra.mxu0 0.0
        %336 = vmatprep.subr.mxu0 0.0
        %337 = vmatpush1.msra.mxu0 0.0
        %338 = vmatprep.subr.mxu0 0.0
        %339 = vmatpush1.msra.mxu0 0.0
        %340 = vmatprep.subr.mxu0 0.0
        %341 = vmatpush1.msra.mxu0 0.0
        %342 = vmatprep.subr.mxu0 0.0
        %343 = vmatpush1.msra.mxu0 0.0
        %344 = vmatprep.subr.mxu0 0.0
        %345 = vmatpush1.msra.mxu0 0.0
        %346 = vmatprep.mubr.f32.mxu0 0.0
        %347 = vmatmul.mubr.f32.gmra.mrb[0].mxu0 %v235
        %v348 = vpop.f32.mrb[0].mxu0
        %v349 = vadd.f32 %v232, %v348
        %v350 = vpop.f32.mrb[0].mxu0
        %351 = vmatprep.mubr.f32.mxu0 0.0
        %352 = vmatmul.mubr.f32.gmra.mrb[0].mxu0 %v238
        %v353 = vpop.f32.mrb[0].mxu0
        %v354 = vadd.f32 %v232, %v353
        %v355 = vpop.f32.mrb[0].mxu0
        %356 = vmatprep.mubr.f32.mxu0 0.0
        %357 = vmatmul.mubr.f32.gmra.mrb[0].mxu0 %v241
        %v358 = vpop.f32.mrb[0].mxu0
        %v359 = vadd.f32 %v232, %v358
        %v360 = vpop.f32.mrb[0].mxu0
        %361 = vmatprep.mubr.f32.mxu0 0.0
        %362 = vmatmul.mubr.f32.gmra.mrb[0].mxu0 %v244
        %v363 = vpop.f32.mrb[0].mxu0
        %v364 = vadd.f32 %v232, %v363
        %v365 = vpop.f32.mrb[0].mxu0
        %366 = vmatprep.mubr.f32.mxu0 0.0
        %367 = vmatmul.mubr.f32.gmra.mrb[0].mxu0 %v247
        %v368 = vpop.f32.mrb[0].mxu0
        %v369 = vadd.f32 %v232, %v368
        %v370 = vpop.f32.mrb[0].mxu0
        %371 = vmatprep.mubr.f32.mxu0 0.0
        %372 = vmatmul.mubr.f32.gmra.mrb[0].mxu0 %v250
        %v373 = vpop.f32.mrb[0].mxu0
        %v374 = vadd.f32 %v232, %v373
        %v375 = vpop.f32.mrb[0].mxu0
        %376 = vmatprep.mubr.f32.mxu0 0.0
        %377 = vmatmul.mubr.f32.gmra.mrb[0].mxu0 %v253
        %v378 = vpop.f32.mrb[0].mxu0
        %v379 = vadd.f32 %v232, %v378
        %v380 = vpop.f32.mrb[0].mxu0
        %381 = vmatprep.mubr.f32.mxu0 0.0
        %382 = vmatmul.mubr.f32.gmra.mrb[0].mxu0 %v256
        %v383 = vpop.f32.mrb[0].mxu0
        %v384 = vadd.f32 %v232, %v383
        %v385 = vpop.f32.mrb[0].mxu0
        %386 = vmatprep.mubr.f32.mxu0 0.0
        %387 = vmatmul.mubr.f32.gmra.mrb[0].mxu0 %v259
        %v388 = vpop.f32.mrb[0].mxu0
        %v389 = vadd.f32 %v232, %v388
        %v390 = vpop.f32.mrb[0].mxu0
        %391 = vmatprep.mubr.f32.mxu0 0.0
        %392 = vmatmul.mubr.f32.gmra.mrb[0].mxu0 %v262
        %v393 = vpop.f32.mrb[0].mxu0
        %v394 = vadd.f32 %v232, %v393
        %v395 = vpop.f32.mrb[0].mxu0
        %396 = vmatprep.mubr.f32.mxu0 0.0
        %397 = vmatmul.mubr.f32.gmra.mrb[0].mxu0 %v265
        %v398 = vpop.f32.mrb[0].mxu0
        %v399 = vadd.f32 %v232, %v398
        %v400 = vpop.f32.mrb[0].mxu0
        %401 = vmatprep.mubr.f32.mxu0 0.0
        %402 = vmatmul.mubr.f32.gmra.mrb[0].mxu0 %v268
        %v403 = vpop.f32.mrb[0].mxu0
        %v404 = vadd.f32 %v232, %v403
        %v405 = vpop.f32.mrb[0].mxu0
        %406 = vmatprep.mubr.f32.mxu0 0.0
        %407 = vmatmul.mubr.f32.gmra.mrb[0].mxu0 %v271
        %v408 = vpop.f32.mrb[0].mxu0
        %v409 = vadd.f32 %v232, %v408
        %v410 = vpop.f32.mrb[0].mxu0
        %411 = vmatprep.mubr.f32.mxu0 0.0
        %412 = vmatmul.mubr.f32.gmra.mrb[0].mxu0 %v274
        %v413 = vpop.f32.mrb[0].mxu0
        %v414 = vadd.f32 %v232, %v413
        %v415 = vpop.f32.mrb[0].mxu0
        %416 = vmatprep.mubr.f32.mxu0 0.0
        %417 = vmatmul.mubr.f32.gmra.mrb[0].mxu0 %v277
        %v418 = vpop.f32.mrb[0].mxu0
        %v419 = vadd.f32 %v232, %v418
        %v420 = vpop.f32.mrb[0].mxu0
        %421 = vmatprep.mubr.f32.mxu0 0.0
        %422 = vmatmul.mubr.f32.gmra.mrb[0].mxu0 %v280
        %v423 = vpop.f32.mrb[0].mxu0
        %v424 = vadd.f32 %v232, %v423
        %v425 = vpop.f32.mrb[0].mxu0
        %426 = vdwg.mxu0
        %v427 = vmax.f32 %v349, 0.0
        %v428 = vmax.f32 %v354, 0.0
        %v429 = vmax.f32 %v359, 0.0
        %v430 = vmax.f32 %v364, 0.0
        %v431 = vmax.f32 %v369, 0.0
        %v432 = vmax.f32 %v374, 0.0
        %v433 = vmax.f32 %v379, 0.0
        %v434 = vmax.f32 %v384, 0.0
        %v435 = vmax.f32 %v389, 0.0
        %v436 = vmax.f32 %v394, 0.0
        %v437 = vmax.f32 %v399, 0.0
        %v438 = vmax.f32 %v404, 0.0
        %v439 = vmax.f32 %v409, 0.0
        %v440 = vmax.f32 %v414, 0.0
        %v441 = vmax.f32 %v419, 0.0
        %v442 = vmax.f32 %v424, 0.0
        %v443 = vld [vmem:[%s2] sm:$0xff]
        %v444 = vld [vmem:[%s2 + $0x8] sm:$0xff]
        %v445 = vld [vmem:[%s2 + $0x10] sm:$0xff]
        %v446 = vld [vmem:[%s2 + $0x18] sm:$0xff]
        %v447 = vlaneseq
        %v448 = vshrl.u32 %v447, 7
        %v449 = vsub.s32 0, %v448
        %v450 = vrot.slane %v200, %v449
        %vm451 = vcmask 261120
        %v453 = vsel %vm451, %v427, 0
        %v456 = vsel %vm451, %v428, 0
        %v459 = vsel %vm451, %v429, 0
        %v462 = vsel %vm451, %v430, 0
        %v465 = vsel %vm451, %v431, 0
        %v468 = vsel %vm451, %v432, 0
        %v471 = vsel %vm451, %v433, 0
        %v474 = vsel %vm451, %v434, 0
        %v477 = vsel %vm451, %v435, 0
        %v480 = vsel %vm451, %v436, 0
        %v483 = vsel %vm451, %v437, 0
        %v486 = vsel %vm451, %v438, 0
        %v489 = vsel %vm451, %v439, 0
        %v492 = vsel %vm451, %v440, 0
        %v495 = vsel %vm451, %v441, 0
        %v498 = vsel %vm451, %v442, 0
        %500 = vmatprep.subr.mxu0 0.0
        %501 = vmatpush1.msra.mxu0 %v443
        %502 = vmatprep.subr.mxu0 0.0
        %503 = vmatpush1.msra.mxu0 %v444
        %504 = vmatprep.subr.mxu0 0.0
        %505 = vmatpush1.msra.mxu0 %v445
        %506 = vmatprep.subr.mxu0 0.0
        %507 = vmatpush1.msra.mxu0 %v446
        %508 = vmatprep.subr.mxu0 0.0
        %509 = vmatpush1.msra.mxu0 0.0
        %510 = vmatprep.subr.mxu0 0.0
        %511 = vmatpush1.msra.mxu0 0.0
        %512 = vmatprep.subr.mxu0 0.0
        %513 = vmatpush1.msra.mxu0 0.0
        %514 = vmatprep.subr.mxu0 0.0
        %515 = vmatpush1.msra.mxu0 0.0
        %516 = vmatprep.subr.mxu0 0.0
        %517 = vmatpush1.msra.mxu0 0.0
        %518 = vmatprep.subr.mxu0 0.0
        %519 = vmatpush1.msra.mxu0 0.0
        %520 = vmatprep.subr.mxu0 0.0
        %521 = vmatpush1.msra.mxu0 0.0
        %522 = vmatprep.subr.mxu0 0.0
        %523 = vmatpush1.msra.mxu0 0.0
        %524 = vmatprep.subr.mxu0 0.0
        %525 = vmatpush1.msra.mxu0 0.0
        %526 = vmatprep.subr.mxu0 0.0
        %527 = vmatpush1.msra.mxu0 0.0
        %528 = vmatprep.subr.mxu0 0.0
        %529 = vmatpush1.msra.mxu0 0.0
        %530 = vmatprep.subr.mxu0 0.0
        %531 = vmatpush1.msra.mxu0 0.0
        %532 = vmatprep.subr.mxu0 0.0
        %533 = vmatpush1.msra.mxu0 0.0
        %534 = vmatprep.subr.mxu0 0.0
        %535 = vmatpush1.msra.mxu0 0.0
        %536 = vmatprep.subr.mxu0 0.0
        %537 = vmatpush1.msra.mxu0 0.0
        %538 = vmatprep.subr.mxu0 0.0
        %539 = vmatpush1.msra.mxu0 0.0
        %540 = vmatprep.subr.mxu0 0.0
        %541 = vmatpush1.msra.mxu0 0.0
        %542 = vmatprep.subr.mxu0 0.0
        %543 = vmatpush1.msra.mxu0 0.0
        %544 = vmatprep.subr.mxu0 0.0
        %545 = vmatpush1.msra.mxu0 0.0
        %546 = vmatprep.subr.mxu0 0.0
        %547 = vmatpush1.msra.mxu0 0.0
        %548 = vmatprep.subr.mxu0 0.0
        %549 = vmatpush1.msra.mxu0 0.0
        %550 = vmatprep.subr.mxu0 0.0
        %551 = vmatpush1.msra.mxu0 0.0
        %552 = vmatprep.subr.mxu0 0.0
        %553 = vmatpush1.msra.mxu0 0.0
        %554 = vmatprep.subr.mxu0 0.0
        %555 = vmatpush1.msra.mxu0 0.0
        %556 = vmatprep.subr.mxu0 0.0
        %557 = vmatpush1.msra.mxu0 0.0
        %558 = vmatprep.subr.mxu0 0.0
        %559 = vmatpush1.msra.mxu0 0.0
        %560 = vmatprep.subr.mxu0 0.0
        %561 = vmatpush1.msra.mxu0 0.0
        %562 = vmatprep.subr.mxu0 0.0
        %563 = vmatpush1.msra.mxu0 0.0
        %564 = vmatprep.mubr.f32.mxu0 0.0
        %565 = vmatmul.mubr.f32.gmra.mrb[0].mxu0 %v453
        %v566 = vpop.f32.mrb[0].mxu0
        %v567 = vadd.f32 %v450, %v566
        %v568 = vpop.f32.mrb[0].mxu0
        %569 = vmatprep.mubr.f32.mxu0 0.0
        %570 = vmatmul.mubr.f32.gmra.mrb[0].mxu0 %v456
        %v571 = vpop.f32.mrb[0].mxu0
        %v572 = vadd.f32 %v450, %v571
        %v573 = vpop.f32.mrb[0].mxu0
        %574 = vmatprep.mubr.f32.mxu0 0.0
        %575 = vmatmul.mubr.f32.gmra.mrb[0].mxu0 %v459
        %v576 = vpop.f32.mrb[0].mxu0
        %v577 = vadd.f32 %v450, %v576
        %v578 = vpop.f32.mrb[0].mxu0
        %579 = vmatprep.mubr.f32.mxu0 0.0
        %580 = vmatmul.mubr.f32.gmra.mrb[0].mxu0 %v462
        %v581 = vpop.f32.mrb[0].mxu0
        %v582 = vadd.f32 %v450, %v581
        %v583 = vpop.f32.mrb[0].mxu0
        %584 = vmatprep.mubr.f32.mxu0 0.0
        %585 = vmatmul.mubr.f32.gmra.mrb[0].mxu0 %v465
        %v586 = vpop.f32.mrb[0].mxu0
        %v587 = vadd.f32 %v450, %v586
        %v588 = vpop.f32.mrb[0].mxu0
        %589 = vmatprep.mubr.f32.mxu0 0.0
        %590 = vmatmul.mubr.f32.gmra.mrb[0].mxu0 %v468
        %v591 = vpop.f32.mrb[0].mxu0
        %v592 = vadd.f32 %v450, %v591
        %v593 = vpop.f32.mrb[0].mxu0
        %594 = vmatprep.mubr.f32.mxu0 0.0
        %595 = vmatmul.mubr.f32.gmra.mrb[0].mxu0 %v471
        %v596 = vpop.f32.mrb[0].mxu0
        %v597 = vadd.f32 %v450, %v596
        %v598 = vpop.f32.mrb[0].mxu0
        %599 = vmatprep.mubr.f32.mxu0 0.0
        %600 = vmatmul.mubr.f32.gmra.mrb[0].mxu0 %v474
        %v601 = vpop.f32.mrb[0].mxu0
        %v602 = vadd.f32 %v450, %v601
        %v603 = vpop.f32.mrb[0].mxu0
        %604 = vmatprep.mubr.f32.mxu0 0.0
        %605 = vmatmul.mubr.f32.gmra.mrb[0].mxu0 %v477
        %v606 = vpop.f32.mrb[0].mxu0
        %v607 = vadd.f32 %v450, %v606
        %v608 = vpop.f32.mrb[0].mxu0
        %609 = vmatprep.mubr.f32.mxu0 0.0
        %610 = vmatmul.mubr.f32.gmra.mrb[0].mxu0 %v480
        %v611 = vpop.f32.mrb[0].mxu0
        %v612 = vadd.f32 %v450, %v611
        %v613 = vpop.f32.mrb[0].mxu0
        %614 = vmatprep.mubr.f32.mxu0 0.0
        %615 = vmatmul.mubr.f32.gmra.mrb[0].mxu0 %v483
        %v616 = vpop.f32.mrb[0].mxu0
        %v617 = vadd.f32 %v450, %v616
        %v618 = vpop.f32.mrb[0].mxu0
        %619 = vmatprep.mubr.f32.mxu0 0.0
        %620 = vmatmul.mubr.f32.gmra.mrb[0].mxu0 %v486
        %v621 = vpop.f32.mrb[0].mxu0
        %v622 = vadd.f32 %v450, %v621
        %v623 = vpop.f32.mrb[0].mxu0
        %624 = vmatprep.mubr.f32.mxu0 0.0
        %625 = vmatmul.mubr.f32.gmra.mrb[0].mxu0 %v489
        %v626 = vpop.f32.mrb[0].mxu0
        %v627 = vadd.f32 %v450, %v626
        %v628 = vpop.f32.mrb[0].mxu0
        %629 = vmatprep.mubr.f32.mxu0 0.0
        %630 = vmatmul.mubr.f32.gmra.mrb[0].mxu0 %v492
        %v631 = vpop.f32.mrb[0].mxu0
        %v632 = vadd.f32 %v450, %v631
        %v633 = vpop.f32.mrb[0].mxu0
        %634 = vmatprep.mubr.f32.mxu0 0.0
        %635 = vmatmul.mubr.f32.gmra.mrb[0].mxu0 %v495
        %v636 = vpop.f32.mrb[0].mxu0
        %v637 = vadd.f32 %v450, %v636
        %v638 = vpop.f32.mrb[0].mxu0
        %639 = vmatprep.mubr.f32.mxu0 0.0
        %640 = vmatmul.mubr.f32.gmra.mrb[0].mxu0 %v498
        %v641 = vpop.f32.mrb[0].mxu0
        %v642 = vadd.f32 %v450, %v641
        %v643 = vpop.f32.mrb[0].mxu0
        %644 = vdwg.mxu0
        %645 = vst [vmem:[%s191] sm:$0xff] %v567
        %646 = vst [vmem:[%s191 + $0x8] sm:$0xff] %v572
        %647 = vst [vmem:[%s191 + $0x10] sm:$0xff] %v577
        %648 = vst [vmem:[%s191 + $0x18] sm:$0xff] %v582
        %649 = vst [vmem:[%s191 + $0x20] sm:$0xff] %v587
        %650 = vst [vmem:[%s191 + $0x28] sm:$0xff] %v592
        %651 = vst [vmem:[%s191 + $0x30] sm:$0xff] %v597
        %652 = vst [vmem:[%s191 + $0x38] sm:$0xff] %v602
        %653 = vst [vmem:[%s191 + $0x40] sm:$0xff] %v607
        %654 = vst [vmem:[%s191 + $0x48] sm:$0xff] %v612
        %655 = vst [vmem:[%s191 + $0x50] sm:$0xff] %v617
        %656 = vst [vmem:[%s191 + $0x58] sm:$0xff] %v622
        %657 = vst [vmem:[%s191 + $0x60] sm:$0xff] %v627
        %658 = vst [vmem:[%s191 + $0x68] sm:$0xff] %v632
        %659 = vst [vmem:[%s191 + $0x70] sm:$0xff] %v637
        %660 = vst [vmem:[%s191 + $0x78] sm:$0xff] %v642
        %s661 = sand.u32 %s115, 1
        %s662 = scalar_lea.sflag [#allocation3], %s661
        %s663 = sand.u32 %s115, 1
        %s664 = smul.addr %s663, 128
        %s665 = scalar_lea.vmem [#allocation2], %s664
        // Predicated region
        $region37: #{tpu_custom_call.1} parent=35 // pred_check
          %p666 = pneg %p125
        $region38: #{tpu_custom_call.1} parent=35 // pred_check_branch
          %668 = sbr.rel (%p666) target = $region40
        $region39: #{tpu_custom_call.1} parent=35 // pred_region
          %s669 = smul.u32 16, %s18
          %s671 = ssub.s32 2048, 2048
          %672 = vsyncadd %s662, %s671
          %s673 = smul.addr %s669, 128
          %s674 = scalar_lea.hbm %s4, %s673
          %s675 = sshll.u32 %s665, 4
          %s676 = int_to_ptr.vmem [resolvable:$true] %s675
          %681 = dma.vmem_to_hbm [thread:$0]  %s676, 2048, %s674, %s662, 128, 128, 8
        $region40: #{tpu_custom_call.1} parent=35 // pred_fallthru
          _
      $region36: #{tpu_custom_call.1} parent=5 // pred_fallthru
        _
      %p682 = scmp.le.s32.totalorder 2, %s13
      // Predicated region
      $region41: #{tpu_custom_call.1} parent=5 // pred_check
        %p683 = pneg %p682
      $region42: #{tpu_custom_call.1} parent=5 // pred_check_branch
        %685 = sbr.rel (%p683) target = $region44
      $region43: #{tpu_custom_call.1} parent=5 // pred_region
        %s686 = ssub.s32 %s13, 2
        // Predicated region
        $region45: #{tpu_custom_call.1} parent=43 // pred_check
          %p687 = pneg %p131
        $region46: #{tpu_custom_call.1} parent=43 // pred_check_branch
          %689 = sbr.rel (%p687) target = $region48
        $region47: #{tpu_custom_call.1} parent=43 // pred_region
          %s690 = sand.u32 %s116, 1
          %s691 = scalar_lea.sflag [#allocation3], %s690
          %s692 = sand.u32 %s116, 1
          %s693 = smul.addr %s692, 128
          %s694 = scalar_lea.vmem [#allocation2], %s693
          %695 = dma.done %s691, 2048
        $region48: #{tpu_custom_call.1} parent=43 // pred_fallthru
          _
      $region44: #{tpu_custom_call.1} parent=5 // pred_fallthru
        _
    $region6: #{tpu_custom_call.1} parent=1 // loop_footer
      %s17 = sadd.s32 1, %s13
    $region7: #{tpu_custom_call.1} parent=1 // loop_footer_branch
      %12 = sbr.rel target = $region3
    $region8: #{tpu_custom_call.1} parent=1 // loop_exit
      _
    %696 = vsyncpa [#allocation3], 1
    %s697 = scalar_lea.sflag [#allocation3], 1
    %698 = vsyncpa %s697, 1

</llo_original>
